<compile_context>
chip_gen: v7x
topology: tpu7x:2x2x1
jax: 0.10.0
libtpu: 0.0.40
codegen_flags: <defaults>
</compile_context>

<pallas_src>
import jax
import jax.numpy as jnp
from jax.experimental import pallas as pl
from jax.experimental.pallas import tpu as pltpu

LANE = 128
SUBLANE = 8


def _chip_defaults():
    """Per-generation (bytes per operand block, outer split) defaults."""
    kind = ""
    try:
        kind = jax.devices()[0].device_kind.lower()
    except Exception:
        pass
    if "v7" in kind or "tpu7" in kind:
        # 2 TensorCores, 3.2 TB/s/TC, 64 MiB VMEM/TC: big blocks + 2-way split.
        return 8 << 20, 2
    if "v5 lite" in kind or "v5e" in kind or "v5lite" in kind:
        # 16 MiB scoped-VMEM default: 2 inputs x 2 buffers x 2 MiB = 8 MiB.
        return 2 << 20, 1
    # v6e-class single-core chips: 4 MiB blocks fit the 32 MiB scoped default.
    return 4 << 20, 1


def _make_dice_kernel(rows, block_rows, n_inner, needs_mask):
    """Build the accumulation kernel for a fixed (static) tiling."""

    def kernel(x_ref, t_ref, o_ref, acc_ref):
        i = pl.program_id(1)

        @pl.when(i == 0)
        def _():
            acc_ref[...] = jnp.zeros_like(acc_ref)

        block_id = pl.program_id(0) * n_inner + i
        row0 = block_id * block_rows

        def add_tile(x, t):
            # Pure VALU accumulation: sum over whole (8,128) vreg slabs.
            xp = x.reshape(block_rows // SUBLANE, SUBLANE, LANE)
            tp = t.reshape(block_rows // SUBLANE, SUBLANE, LANE)
            acc_ref[0] += jnp.sum(xp * tp, axis=0)
            acc_ref[1] += jnp.sum(xp + tp, axis=0)

        if not needs_mask:
            # Static fast path: every block is fully in range.
            add_tile(x_ref[...].astype(jnp.float32),
                     t_ref[...].astype(jnp.float32))
        else:
            in_range = row0 + block_rows <= rows

            @pl.when(in_range)
            def _():
                add_tile(x_ref[...].astype(jnp.float32),
                         t_ref[...].astype(jnp.float32))

            @pl.when(jnp.logical_not(in_range) & (row0 < rows))
            def _():
                # Overhanging last block: zero rows past the true extent
                # (Pallas partial-block DMA leaves garbage there).
                x = x_ref[...].astype(jnp.float32)
                t = t_ref[...].astype(jnp.float32)
                ridx = row0 + jax.lax.broadcasted_iota(jnp.int32, x.shape, 0)
                valid = ridx < rows
                add_tile(jnp.where(valid, x, 0.0), jnp.where(valid, t, 0.0))
            # row0 >= rows: duplicated tail block (clamped index_map) -> skip.

        @pl.when(i == n_inner - 1)
        def _():
            # Single sublane (XLU) reduce + store per outer group.
            o_ref[...] = jnp.sum(acc_ref[...], axis=1)[None]

    return kernel


def dice_loss(inputs, targets, smooth=1, *, block_rows=None, n_outer=None):
    # `smooth` kept for signature parity with the PyTorch module; the reference
    # forward ignores it and hard-codes 1e-06.
    del smooth
    x = inputs.reshape(-1)
    t = targets.reshape(-1)
    n = x.shape[0]

    rows = n // LANE
    n_main = rows * LANE

    if rows == 0:
        # Degenerate tiny input: plain JAX.
        xf = x.astype(jnp.float32)
        tf = t.astype(jnp.float32)
        inter = jnp.sum(xf * tf)
        denom = jnp.sum(xf) + jnp.sum(tf)
        return 1.0 - (2.0 * inter + 1e-06) / (denom + 1e-06)

    x2 = x[:n_main].reshape(rows, LANE)
    t2 = t[:n_main].reshape(rows, LANE)

    block_bytes, default_outer = _chip_defaults()
    x_isz = jnp.dtype(x2.dtype).itemsize
    t_isz = jnp.dtype(t2.dtype).itemsize
    itemsize = max(x_isz, t_isz)
    # Sublane packing: 8 for 4-byte, 16 for 2-byte, 32 for 1-byte dtypes.
    packing = max(SUBLANE, 32 // min(x_isz, t_isz))

    if block_rows is None:
        block_rows = block_bytes // (itemsize * LANE)
    block_rows = min(block_rows, pl.cdiv(rows, packing) * packing)
    block_rows = max(packing, (block_rows // packing) * packing)

    total_blocks = pl.cdiv(rows, block_rows)
    if n_outer is None:
        n_outer = default_outer
    n_outer = min(max(int(n_outer), 1), total_blocks)
    n_inner = pl.cdiv(total_blocks, n_outer)

    clamp = (n_outer * n_inner) > total_blocks
    needs_mask = (n_outer * n_inner * block_rows) != rows
    last_block = total_blocks - 1

    def in_map(o, i):
        b = o * n_inner + i
        if clamp:
            # Duplicated tail block re-reads the last valid block; the kernel
            # skips its contribution entirely.
            b = jnp.minimum(b, last_block)
        return (b, 0)

    kernel = _make_dice_kernel(rows, block_rows, n_inner, needs_mask)

    # 2 inputs x 2 pipeline buffers x block bytes, plus headroom for the
    # (2,8,128) scratch, output blocks and internal scratch.
    block_in_bytes = block_rows * LANE * (x_isz + t_isz)
    vmem_limit = int(2 * block_in_bytes + (4 << 20))

    partials = pl.pallas_call(
        kernel,
        out_shape=jax.ShapeDtypeStruct((n_outer, 2, LANE), jnp.float32),
        grid_spec=pltpu.PrefetchScalarGridSpec(
            num_scalar_prefetch=0,
            grid=(n_outer, n_inner),
            in_specs=[
                pl.BlockSpec((block_rows, LANE), in_map),
                pl.BlockSpec((block_rows, LANE), in_map),
            ],
            out_specs=pl.BlockSpec((1, 2, LANE), lambda o, i: (o, 0, 0)),
            scratch_shapes=[pltpu.VMEM((2, SUBLANE, LANE), jnp.float32)],
        ),
        compiler_params=pltpu.CompilerParams(
            # TODO(synk): on v7x, verify via profile that the leading
            # "parallel" axis is actually core-sharded; if one TensorCore sits
            # idle, switch it to pltpu.CORE_PARALLEL / an explicit core_map.
            dimension_semantics=("parallel", "arbitrary"),
            vmem_limit_bytes=vmem_limit),
    )(x2, t2)

    # Tiny epilogue: combine per-core / per-lane partials.
    intersection = jnp.sum(partials[:, 0, :])
    denom = jnp.sum(partials[:, 1, :])

    # Ragged tail (< 128 elements): fold in directly, no padded HBM copy.
    if n_main != n:
        xt = x[n_main:].astype(jnp.float32)
        tt = t[n_main:].astype(jnp.float32)
        intersection = intersection + jnp.sum(xt * tt)
        denom = denom + jnp.sum(xt + tt)

    dice = (2.0 * intersection + 1e-06) / (denom + 1e-06)
    return 1.0 - dice


def _dice_ref(inputs, targets):
    xf = inputs.reshape(-1).astype(jnp.float32)
    tf = targets.reshape(-1).astype(jnp.float32)
    inter = jnp.sum(xf * tf)
    return 1.0 - (2.0 * inter + 1e-06) / (jnp.sum(xf) + jnp.sum(tf) + 1e-06)


if __name__ == "__main__":
    key = jax.random.PRNGKey(0)
    k1, k2, k3, k4, k5, k6, k7, k8 = jax.random.split(key, 8)

    # 1) Typical segmentation shape (NCHW), lane-aligned: single unmasked block.
    x1 = jax.nn.sigmoid(jax.random.normal(k1, (2, 4, 16, 16), dtype=jnp.float32))
    t1 = (jax.random.uniform(k2, (2, 4, 16, 16)) > 0.5).astype(jnp.float32)
    l1 = jax.block_until_ready(dice_loss(x1, t1))
    r1 = _dice_ref(x1, t1)
    assert jnp.allclose(l1, r1, rtol=1e-5, atol=1e-6), (l1, r1)

    # 2) Multi-block path with forced small blocks: rows=72, block_rows=16 ->
    #    overhanging last block exercises the gated mask path.
    x2 = jax.nn.sigmoid(jax.random.normal(k3, (2, 4, 32, 36), dtype=jnp.float32))
    t2 = (jax.random.uniform(k4, (2, 4, 32, 36)) > 0.5).astype(jnp.float32)
    l2 = jax.block_until_ready(dice_loss(x2, t2, block_rows=16))
    r2 = _dice_ref(x2, t2)
    assert jnp.allclose(l2, r2, rtol=1e-5, atol=1e-6), (l2, r2)

    # 3) Forced 2-way outer split with an odd block count: exercises the
    #    clamped duplicate tail block (skipped in-kernel) on any chip.
    l3 = jax.block_until_ready(dice_loss(x2, t2, block_rows=8, n_outer=2))
    assert jnp.allclose(l3, r2, rtol=1e-5, atol=1e-6), (l3, r2)

    # 4) Non-128-divisible element count: exercises the ragged-tail epilogue
    #    (no padded HBM copy) plus the masked last partial block.
    x4 = jax.nn.sigmoid(jax.random.normal(k5, (1, 3, 17, 19), dtype=jnp.float32))
    t4 = (jax.random.uniform(k6, (1, 3, 17, 19)) > 0.5).astype(jnp.float32)
    l4 = jax.block_until_ready(dice_loss(x4, t4))
    r4 = _dice_ref(x4, t4)
    assert jnp.allclose(l4, r4, rtol=1e-5, atol=1e-6), (l4, r4)

    # 5) bf16 inputs: exercises native-dtype DMA + dtype-scaled block rounding.
    x5 = jax.nn.sigmoid(jax.random.normal(k7, (2, 4, 16, 16))).astype(jnp.bfloat16)
    t5 = (jax.random.uniform(k8, (2, 4, 16, 16)) > 0.5).astype(jnp.bfloat16)
    l5 = jax.block_until_ready(dice_loss(x5, t5))
    r5 = _dice_ref(x5, t5)
    assert jnp.allclose(l5, r5, rtol=1e-4, atol=1e-5), (l5, r5)

    print("KERNEL_OK")
</pallas_src>

<mosaic_0001>
module attributes {stable_mosaic.version = 11 : i64} {
  func.func @kernel(%arg0: i32, %arg1: i32, %arg2: memref<16x128xf32, #tpu.memory_space<vmem>>, %arg3: memref<16x128xf32, #tpu.memory_space<vmem>>, %arg4: memref<1x2x128xf32, #tpu.memory_space<vmem>>, %arg5: memref<2x8x128xf32, #tpu.memory_space<vmem>>) attributes {dimension_semantics = [#tpu.dimension_semantics<parallel>, #tpu.dimension_semantics<arbitrary>], iteration_bounds = array<i64: 1, 1>, scalar_prefetch = 0 : i64, scratch_operands = 1 : i64, tpu.core_type = #tpu.core_type<tc>, window_params = [{transform_indices = @transform_0, window_bounds = array<i64: 16, 128>}, {transform_indices = @transform_1, window_bounds = array<i64: 16, 128>}, {transform_indices = @transform_2, window_bounds = array<i64: 1, 2, 128>}]} {
    %c0_i32 = arith.constant 0 : i32
    %0 = arith.cmpi eq, %arg1, %c0_i32 : i32
    %1 = arith.extui %0 : i1 to i32
    %c0_i32_0 = arith.constant 0 : i32
    %2 = arith.cmpi ne, %1, %c0_i32_0 : i32
    scf.if %2 {
      %cst_18 = arith.constant 0.000000e+00 : f32
      %26 = vector.broadcast %cst_18 : f32 to vector<2x8x128xf32>
      %c0_19 = arith.constant 0 : index
      %c0_20 = arith.constant 0 : index
      %c0_21 = arith.constant 0 : index
      %27 = vector.load %arg5[%c0_19, %c0_20, %c0_21] : memref<2x8x128xf32, #tpu.memory_space<vmem>>, vector<2x8x128xf32>
      tpu.vector_store %arg5[%c0_19, %c0_20, %c0_21], %26 {strides = array<i32>} : memref<2x8x128xf32, #tpu.memory_space<vmem>>, vector<2x8x128xf32>,
    } else {
    }
    %c0 = arith.constant 0 : index
    %c0_1 = arith.constant 0 : index
    %3 = vector.load %arg2[%c0, %c0_1] : memref<16x128xf32, #tpu.memory_space<vmem>>, vector<16x128xf32>
    %c0_2 = arith.constant 0 : index
    %c0_3 = arith.constant 0 : index
    %4 = vector.load %arg3[%c0_2, %c0_3] : memref<16x128xf32, #tpu.memory_space<vmem>>, vector<16x128xf32>
    %5 = vector.shape_cast %3 : vector<16x128xf32> to vector<2x8x128xf32>
    %6 = vector.shape_cast %4 : vector<16x128xf32> to vector<2x8x128xf32>
    %c0_4 = arith.constant 0 : index
    %c0_5 = arith.constant 0 : index
    %c0_6 = arith.constant 0 : index
    %7 = vector.load %arg5[%c0_4, %c0_5, %c0_6] : memref<2x8x128xf32, #tpu.memory_space<vmem>>, vector<1x8x128xf32>
    %8 = vector.shape_cast %7 : vector<1x8x128xf32> to vector<8x128xf32>
    %9 = arith.mulf %5, %6 : vector<2x8x128xf32>
    %cst = arith.constant dense<0.000000e+00> : vector<8x128xf32>
    %10 = vector.multi_reduction <add>, %9, %cst [0] : vector<2x8x128xf32> to vector<8x128xf32>
    %11 = arith.addf %8, %10 : vector<8x128xf32>
    %c0_7 = arith.constant 0 : index
    %c0_8 = arith.constant 0 : index
    %c0_9 = arith.constant 0 : index
    %12 = vector.load %arg5[%c0_7, %c0_8, %c0_9] : memref<2x8x128xf32, #tpu.memory_space<vmem>>, vector<1x8x128xf32>
    %13 = vector.shape_cast %12 : vector<1x8x128xf32> to vector<8x128xf32>
    %14 = vector.shape_cast %11 : vector<8x128xf32> to vector<1x8x128xf32>
    tpu.vector_store %arg5[%c0_7, %c0_8, %c0_9], %14 {strides = array<i32>} : memref<2x8x128xf32, #tpu.memory_space<vmem>>, vector<1x8x128xf32>,
    %c1 = arith.constant 1 : index
    %c0_10 = arith.constant 0 : index
    %c0_11 = arith.constant 0 : index
    %15 = vector.load %arg5[%c1, %c0_10, %c0_11] : memref<2x8x128xf32, #tpu.memory_space<vmem>>, vector<1x8x128xf32>
    %16 = vector.shape_cast %15 : vector<1x8x128xf32> to vector<8x128xf32>
    %17 = arith.addf %5, %6 : vector<2x8x128xf32>
    %cst_12 = arith.constant dense<0.000000e+00> : vector<8x128xf32>
    %18 = vector.multi_reduction <add>, %17, %cst_12 [0] : vector<2x8x128xf32> to vector<8x128xf32>
    %19 = arith.addf %16, %18 : vector<8x128xf32>
    %c1_13 = arith.constant 1 : index
    %c0_14 = arith.constant 0 : index
    %c0_15 = arith.constant 0 : index
    %20 = vector.load %arg5[%c1_13, %c0_14, %c0_15] : memref<2x8x128xf32, #tpu.memory_space<vmem>>, vector<1x8x128xf32>
    %21 = vector.shape_cast %20 : vector<1x8x128xf32> to vector<8x128xf32>
    %22 = vector.shape_cast %19 : vector<8x128xf32> to vector<1x8x128xf32>
    tpu.vector_store %arg5[%c1_13, %c0_14, %c0_15], %22 {strides = array<i32>} : memref<2x8x128xf32, #tpu.memory_space<vmem>>, vector<1x8x128xf32>,
    %c0_i32_16 = arith.constant 0 : i32
    %23 = arith.cmpi eq, %arg1, %c0_i32_16 : i32
    %24 = arith.extui %23 : i1 to i32
    %c0_i32_17 = arith.constant 0 : i32
    %25 = arith.cmpi ne, %24, %c0_i32_17 : i32
    scf.if %25 {
      %c0_18 = arith.constant 0 : index
      %c0_19 = arith.constant 0 : index
      %c0_20 = arith.constant 0 : index
      %26 = vector.load %arg5[%c0_18, %c0_19, %c0_20] : memref<2x8x128xf32, #tpu.memory_space<vmem>>, vector<2x8x128xf32>
      %cst_21 = arith.constant dense<0.000000e+00> : vector<2x128xf32>
      %27 = vector.multi_reduction <add>, %26, %cst_21 [1] : vector<2x8x128xf32> to vector<2x128xf32>
      %28 = vector.shape_cast %27 : vector<2x128xf32> to vector<1x2x128xf32>
      %c0_22 = arith.constant 0 : index
      %c0_23 = arith.constant 0 : index
      %c0_24 = arith.constant 0 : index
      %29 = vector.load %arg4[%c0_22, %c0_23, %c0_24] : memref<1x2x128xf32, #tpu.memory_space<vmem>>, vector<1x2x128xf32>
      tpu.vector_store %arg4[%c0_22, %c0_23, %c0_24], %28 {strides = array<i32>} : memref<1x2x128xf32, #tpu.memory_space<vmem>>, vector<1x2x128xf32>,
    } else {
    }
    return
  }
  func.func @transform_0(%arg0: i32, %arg1: i32) -> (i32, i32) {
    %c1_i32 = arith.constant 1 : i32
    %0 = arith.muli %arg0, %c1_i32 : i32
    %1 = arith.addi %0, %arg1 : i32
    %c0_i32 = arith.constant 0 : i32
    %c0_i32_0 = arith.constant 0 : i32
    return %1, %c0_i32 : i32, i32
  }
  func.func @transform_1(%arg0: i32, %arg1: i32) -> (i32, i32) {
    %c1_i32 = arith.constant 1 : i32
    %0 = arith.muli %arg0, %c1_i32 : i32
    %1 = arith.addi %0, %arg1 : i32
    %c0_i32 = arith.constant 0 : i32
    %c0_i32_0 = arith.constant 0 : i32
    return %1, %c0_i32 : i32, i32
  }
  func.func @transform_2(%arg0: i32, %arg1: i32) -> (i32, i32, i32) {
    %c0_i32 = arith.constant 0 : i32
    %c0_i32_0 = arith.constant 0 : i32
    %c0_i32_1 = arith.constant 0 : i32
    return %arg0, %c0_i32, %c0_i32_0 : i32, i32, i32
  }
}

</mosaic_0001>

<llo_original>
// kernel: tpu_custom_call.1
$region0: #{tpu_custom_call.1}
  #allocation0 [shape = 'u32[]', space=smem, size = 0x4, offset = 0x4, fixed_abs, tag = 'smem constant byte address 0x4 - core index']
  #allocation1 [shape = 'u32[144,128]{1,0:T(1,128)}', space=vmem, size = 0x12000, scoped, tag = 'internal scratch']
  #allocation2 [shape = 'f32[2,8,128]{2,1,0:T(8,128)}', space=vmem, size = 0x2000, scoped, tag = 'scratch operand']
  %s0 = inlined_call_operand.hbm [shape: f32[16,128], index: 0, kind: input, shape index: {}]
  %s1 = inlined_call_operand.hbm [shape: f32[16,128], index: 1, kind: input, shape index: {}]
  %s2 = inlined_call_operand.hbm [shape: f32[1,2,128], index: 2, kind: output, shape index: {}]
  %s3 = sld [smem:[#allocation0]]
  $region34: #{tpu_custom_call.1} parent=0
    _
  %s5 = ssub.s32 1, %s3
  %s6 = scalar_select 0, %s5, %s3
  $region1: #{tpu_custom_call.1} parent=0
    #allocation3 [shape = 'u8[8192]{0}', space=vmem, size = 0x2000, scoped, tag = 'input window, operand 0, single buffered']
    #allocation4 [shape = 's32[1]{0}', space=sflag, size = 0x4, scoped, tag = 'scoped memory for tpu_custom_call.1']
    #allocation5 [shape = 's32[1]{0}', space=sflag, size = 0x4, scoped, tag = 'scoped memory for tpu_custom_call.1']
    #allocation6 [shape = 'u8[8192]{0}', space=vmem, size = 0x2000, scoped, tag = 'input window, operand 1, single buffered']
    #allocation7 [shape = 's32[1]{0}', space=sflag, size = 0x4, scoped, tag = 'scoped memory for tpu_custom_call.1']
    #allocation8 [shape = 'u8[1024]{0}', space=vmem, size = 0x400, scoped, tag = 'output window, operand 0, single buffered']
    %7 = vsyncpa [#allocation4], 0
    %8 = vsyncpa [#allocation7], 0
    %9 = vsyncpa [#allocation5], 0
    // Predicated region
    $region2: #{tpu_custom_call.1} parent=1 // pred_check
      _
    $region3: #{tpu_custom_call.1} parent=1 // pred_check_branch
      %11 = sbr.rel (0) target = $region5
    $region4: #{tpu_custom_call.1} parent=1 // pred_region
      %s12 = sadd.s32 0, 0
      %s13 = smul.u32 2, %s12
      %s15 = ssub.s32 256, 256
      %16 = vsyncadd [#allocation4], %s15
      %s17 = smul.addr %s13, 128
      %s18 = scalar_lea.hbm %s0, %s17
      %s19 = sshll.u32 [#allocation3], 4
      %s20 = int_to_ptr.vmem [resolvable:$true] %s19
      %25 = dma.hbm_to_vmem [thread:$0]  %s18, 256, %s20, [#allocation4], 128, 128, 8
    $region5: #{tpu_custom_call.1} parent=1 // pred_fallthru
      _
    // Predicated region
    $region6: #{tpu_custom_call.1} parent=1 // pred_check
      _
    $region7: #{tpu_custom_call.1} parent=1 // pred_check_branch
      %27 = sbr.rel (0) target = $region9
    $region8: #{tpu_custom_call.1} parent=1 // pred_region
      %s28 = sadd.s32 0, 0
      %s29 = smul.u32 2, %s28
      %s31 = ssub.s32 256, 256
      %32 = vsyncadd [#allocation7], %s31
      %s33 = smul.addr %s29, 128
      %s34 = scalar_lea.hbm %s1, %s33
      %s35 = sshll.u32 [#allocation6], 4
      %s36 = int_to_ptr.vmem [resolvable:$true] %s35
      %41 = dma.hbm_to_vmem [thread:$0]  %s34, 256, %s36, [#allocation7], 128, 128, 8
    $region9: #{tpu_custom_call.1} parent=1 // pred_fallthru
      _
    // Predicated region
    $region10: #{tpu_custom_call.1} parent=1 // pred_check
      _
    $region11: #{tpu_custom_call.1} parent=1 // pred_check_branch
      %43 = sbr.rel (0) target = $region13
    $region12: #{tpu_custom_call.1} parent=1 // pred_region
      %44 = dma.done [#allocation4], 256
    $region13: #{tpu_custom_call.1} parent=1 // pred_fallthru
      _
    // Predicated region
    $region14: #{tpu_custom_call.1} parent=1 // pred_check
      _
    $region15: #{tpu_custom_call.1} parent=1 // pred_check_branch
      %46 = sbr.rel (0) target = $region17
    $region16: #{tpu_custom_call.1} parent=1 // pred_region
      %47 = dma.done [#allocation7], 256
    $region17: #{tpu_custom_call.1} parent=1 // pred_fallthru
      _
    %s48 = sadd.s32 0, 0
    %s49 = smul.u32 2, %s48
    %s50 = sadd.s32 0, 0
    %s51 = smul.u32 2, %s50
    %p52 = scmp.eq.s32.totalorder 0, 0
    // Predicated region
    $region18: #{tpu_custom_call.1} parent=1 // pred_check
      %p53 = pneg %p52
    $region19: #{tpu_custom_call.1} parent=1 // pred_check_branch
      %55 = sbr.rel (%p53) target = $region21
    $region20: #{tpu_custom_call.1} parent=1 // pred_region
      %56 = vst [vmem:[#allocation2] sm:$0xff] 0.0
      %57 = vst [vmem:[#allocation2 + $0x8] sm:$0xff] 0.0
    $region21: #{tpu_custom_call.1} parent=1 // pred_fallthru
      _
    %v58 = vld [vmem:[#allocation3] sm:$0xff]
    %v59 = vld [vmem:[#allocation3 + $0x8] sm:$0xff]
    %v60 = vld [vmem:[#allocation6] sm:$0xff]
    %v61 = vld [vmem:[#allocation6 + $0x8] sm:$0xff]
    %v62 = vld [vmem:[#allocation2] sm:$0xff]
    %v63 = vmul.f32 %v58, %v60
    %v64 = vmul.f32 %v59, %v61
    %v65 = vadd.f32 %v63, %v64
    %v66 = vadd.f32 %v62, %v65
    %67 = vst [vmem:[#allocation2] sm:$0xff] %v66
    %s68 = scalar_lea.vmem [#allocation2], 8
    %v69 = vld [vmem:[%s68] sm:$0xff]
    %v70 = vadd.f32 %v58, %v60
    %v71 = vadd.f32 %v59, %v61
    %v72 = vadd.f32 %v70, %v71
    %v73 = vadd.f32 %v69, %v72
    %74 = vst [vmem:[%s68] sm:$0xff] %v73
    // Predicated region
    $region22: #{tpu_custom_call.1} parent=1 // pred_check
      %p75 = pneg %p52
    $region23: #{tpu_custom_call.1} parent=1 // pred_check_branch
      %77 = sbr.rel (%p75) target = $region25
    $region24: #{tpu_custom_call.1} parent=1 // pred_region
      %v78 = vld [vmem:[#allocation2] sm:$0xff]
      %v79 = vld [vmem:[#allocation2 + $0x8] sm:$0xff]
      %v80 = vrot.slane %v78, 4
      %v81 = vadd.f32 %v78, %v80
      %v82 = vrot.slane %v81, 2
      %v83 = vadd.f32 %v81, %v82
      %v84 = vrot.slane %v83, 1
      %v85 = vadd.f32 %v83, %v84
      %v86 = vrot.slane %v79, 4
      %v87 = vadd.f32 %v79, %v86
      %v88 = vrot.slane %v87, 2
      %v89 = vadd.f32 %v87, %v88
      %v90 = vrot.slane %v89, 1
      %v91 = vadd.f32 %v89, %v90
      %vm94 = vcmask 1041409
      %v95 = vsel %vm94, %v91, %v85
      %97 = vst [vmem:[#allocation8] sm:$0x3] %v95
    $region25: #{tpu_custom_call.1} parent=1 // pred_fallthru
      _
    // Predicated region
    $region26: #{tpu_custom_call.1} parent=1 // pred_check
      _
    $region27: #{tpu_custom_call.1} parent=1 // pred_check_branch
      %99 = sbr.rel (0) target = $region29
    $region28: #{tpu_custom_call.1} parent=1 // pred_region
      %s101 = ssub.s32 32, 32
      %102 = vsyncadd [#allocation5], %s101
      %s104 = sshll.u32 [#allocation8], 4
      %s105 = int_to_ptr.vmem [resolvable:$true] %s104
      %107 = dma.vmem_to_hbm [thread:$0]  %s105, 32, %s2, [#allocation5]
    $region29: #{tpu_custom_call.1} parent=1 // pred_fallthru
      _
    // Predicated region
    $region30: #{tpu_custom_call.1} parent=1 // pred_check
      _
    $region31: #{tpu_custom_call.1} parent=1 // pred_check_branch
      %109 = sbr.rel (0) target = $region33
    $region32: #{tpu_custom_call.1} parent=1 // pred_region
      %110 = dma.done [#allocation5], 32
    $region33: #{tpu_custom_call.1} parent=1 // pred_fallthru
      _
    %111 = vsyncpa [#allocation4], 1
    %112 = vsyncpa [#allocation7], 1
    %113 = vsyncpa [#allocation5], 1

</llo_original>
